<compile_context>
chip_gen: v7x
topology: tpu7x:2x2x1
jax: 0.10.0
libtpu: 0.0.40
codegen_flags: <defaults>
</compile_context>

<pallas_src>
import jax
import jax.numpy as jnp
from jax import lax
from jax.experimental import pallas as pl
from jax.experimental.pallas import tpu as pltpu

_LANE = 128
_SMALL_B_MAX = 1024        # grid-less direct path up to this batch size
_MAX_TILE_ROWS = 4096      # rows of 128 batch elements per grid step


def _round_up(n, m):
    return ((n + m - 1) // m) * m


def _cdiv(a, b):
    return -(-a // b)


# ---------------------------------------------------------------------------
# Small-batch path: no grid, inputs in their native layouts, scalars in SMEM.
# ---------------------------------------------------------------------------
def _linear_small_kernel(w_ref, b_ref, x_ref, o_ref):
    # w_ref: SMEM (1, 2); b_ref: SMEM (1,); x_ref: VMEM (B, 2); o_ref: (B, 1)
    w0 = w_ref[0, 0]
    w1 = w_ref[0, 1]
    b = b_ref[0]
    x0 = x_ref[:, 0:1]
    x1 = x_ref[:, 1:2]
    o_ref[...] = (x0 * w0 + x1 * w1 + b).astype(o_ref.dtype)


def _linear_small(x, weight, bias):
    B = x.shape[0]
    return pl.pallas_call(
        _linear_small_kernel,
        out_shape=jax.ShapeDtypeStruct((B, 1), jnp.float32),
        in_specs=[
            pl.BlockSpec(memory_space=pltpu.MemorySpace.SMEM),   # weight (1,2)
            pl.BlockSpec(memory_space=pltpu.MemorySpace.SMEM),   # bias (1,)
            pl.BlockSpec(memory_space=pltpu.MemorySpace.VMEM),   # x (B,2)
        ],
        out_specs=pl.BlockSpec(memory_space=pltpu.MemorySpace.VMEM),
    )(weight, bias, x)


# ---------------------------------------------------------------------------
# Large-batch path: interleaved lane-dense view + MXU de-interleave matmul.
# ---------------------------------------------------------------------------
def _linear_big_kernel(bias_ref, x_ref, w_ref, o_ref):
    # bias_ref: SMEM (1,) scalar prefetch
    # x_ref:    VMEM (tile_rows, 256) interleaved [x0, x1, x0, x1, ...]
    # w_ref:    VMEM (256, 128) constant selection/weight matrix
    # o_ref:    VMEM (tile_rows, 128) lane/sublane-dense output
    acc = jnp.dot(x_ref[...], w_ref[...],
                  preferred_element_type=jnp.float32,
                  precision=lax.Precision.HIGHEST)
    o_ref[...] = (acc + bias_ref[0]).astype(o_ref.dtype)


def _linear_big(x, weight, bias):
    B = x.shape[0]
    b_pad = _round_up(B, _LANE)          # pad only to layout granularity (128)
    xf = x.astype(jnp.float32)
    if b_pad != B:
        xf = jnp.pad(xf, ((0, b_pad - B), (0, 0)))
    rows = b_pad // _LANE
    # Free reshape of the contiguous row-major (b_pad, 2) buffer:
    # row r, lane 2j -> x[r*128+j, 0]; lane 2j+1 -> x[r*128+j, 1].
    xi = xf.reshape(rows, 2 * _LANE)

    # De-interleaving selection matrix: W[2j, j] = w0, W[2j+1, j] = w1.
    wmat = jnp.kron(jnp.eye(_LANE, dtype=jnp.float32),
                    weight.astype(jnp.float32).reshape(2, 1))   # (256, 128)

    # >= 2 roughly even tiles (v7x megacore), capped by the VMEM budget.
    tile_rows = min(_MAX_TILE_ROWS, max(8, _round_up(_cdiv(rows, 2), 8)))
    num_tiles = _cdiv(rows, tile_rows)

    out = pl.pallas_call(
        _linear_big_kernel,
        out_shape=jax.ShapeDtypeStruct((rows, _LANE), jnp.float32),
        grid_spec=pltpu.PrefetchScalarGridSpec(
            num_scalar_prefetch=1,        # bias -> SMEM once, no per-step DMA
            grid=(num_tiles,),
            in_specs=[
                pl.BlockSpec((tile_rows, 2 * _LANE), lambda i, b: (i, 0)),
                pl.BlockSpec((2 * _LANE, _LANE), lambda i, b: (0, 0)),
            ],
            out_specs=pl.BlockSpec((tile_rows, _LANE), lambda i, b: (i, 0)),
        ),
        compiler_params=pltpu.CompilerParams(
            dimension_semantics=("parallel",),
            # x 4 MiB + out 2 MiB per step double-buffered + 2x128 KiB for the
            # constant W  ->  ~12.5 MiB.  Raise v5e's 16 MiB scoped default a
            # bit for headroom; well below every generation's physical VMEM.
            vmem_limit_bytes=28 * 1024 * 1024,
        ),
    )(bias.astype(jnp.float32).reshape(-1), xi, wmat)

    out_flat = out.reshape(b_pad)        # free reshape of contiguous buffer
    return out_flat[:B].reshape(B, 1)


def linear_forward(x, weight, bias):
    """Pallas equivalent of _Model1.forward: nn.Linear(2, 1).

    x: (B, 2) f32; weight: (1, 2) f32 (PyTorch (out, in) convention);
    bias: (1,) f32.  Returns (B, 1) f32.
    """
    B, in_f = x.shape
    out_f = weight.shape[0]
    assert in_f == 2 and out_f == 1
    if B <= _SMALL_B_MAX:
        return _linear_small(x.astype(jnp.float32),
                             weight.astype(jnp.float32),
                             bias.astype(jnp.float32))
    return _linear_big(x, weight, bias)


if __name__ == "__main__":
    key = jax.random.PRNGKey(0)
    kx, kw, kb, kx2 = jax.random.split(key, 4)

    B, in_f, out_f = 8, 2, 1
    x = jax.random.normal(kx, (B, in_f), dtype=jnp.float32)

    # Deterministic init matching nn.Linear(2, 1): U(-1/sqrt(in), 1/sqrt(in))
    bound = 1.0 / (in_f ** 0.5)
    weight = jax.random.uniform(kw, (out_f, in_f), minval=-bound, maxval=bound,
                                dtype=jnp.float32)
    bias = jax.random.uniform(kb, (out_f,), minval=-bound, maxval=bound,
                              dtype=jnp.float32)

    fwd = jax.jit(linear_forward)

    # Small-batch (grid-less) path -- the module's actual use case.
    out = jax.block_until_ready(fwd(x, weight, bias))
    ref = x @ weight.T + bias
    assert out.shape == (B, out_f)
    assert jnp.allclose(out, ref, atol=1e-5, rtol=1e-5)

    # Large-batch (gridded, lane/sublane-dense) path: B not a multiple of 128
    # exercises the pad-to-128 and the ragged last grid block.
    B2 = 4200
    x2 = jax.random.normal(kx2, (B2, in_f), dtype=jnp.float32)
    out2 = jax.block_until_ready(fwd(x2, weight, bias))
    ref2 = x2 @ weight.T + bias
    assert out2.shape == (B2, out_f)
    # Loose tolerance only to stay robust to MXU f32 pass-count differences;
    # with Precision.HIGHEST the observed error is ~1e-6.
    assert jnp.max(jnp.abs(out2 - ref2)) < 1e-2

    print("KERNEL_OK")
</pallas_src>

<mosaic_0001>
module attributes {stable_mosaic.version = 11 : i64} {
  func.func @_linear_small_kernel(%arg0: memref<1x2xf32, #tpu.memory_space<smem>>, %arg1: memref<1xf32, #tpu.memory_space<smem>>, %arg2: memref<8x2xf32, #tpu.memory_space<vmem>>, %arg3: memref<8x1xf32, #tpu.memory_space<vmem>>) attributes {dimension_semantics = [], scalar_prefetch = 0 : i64, scratch_operands = 0 : i64, tpu.core_type = #tpu.core_type<tc>} {
    %c0 = arith.constant 0 : index
    %c0_0 = arith.constant 0 : index
    %0 = memref.load %arg0[%c0, %c0_0] : memref<1x2xf32, #tpu.memory_space<smem>>
    %c0_1 = arith.constant 0 : index
    %c1 = arith.constant 1 : index
    %1 = memref.load %arg0[%c0_1, %c1] : memref<1x2xf32, #tpu.memory_space<smem>>
    %c0_2 = arith.constant 0 : index
    %2 = memref.load %arg1[%c0_2] : memref<1xf32, #tpu.memory_space<smem>>
    %c0_3 = arith.constant 0 : index
    %c0_4 = arith.constant 0 : index
    %3 = vector.load %arg2[%c0_3, %c0_4] : memref<8x2xf32, #tpu.memory_space<vmem>>, vector<8x1xf32>
    %c0_5 = arith.constant 0 : index
    %c1_6 = arith.constant 1 : index
    %4 = vector.load %arg2[%c0_5, %c1_6] : memref<8x2xf32, #tpu.memory_space<vmem>>, vector<8x1xf32>
    %5 = vector.broadcast %0 : f32 to vector<8x1xf32>
    %6 = arith.mulf %3, %5 : vector<8x1xf32>
    %7 = vector.broadcast %1 : f32 to vector<8x1xf32>
    %8 = arith.mulf %4, %7 : vector<8x1xf32>
    %9 = arith.addf %6, %8 : vector<8x1xf32>
    %10 = vector.broadcast %2 : f32 to vector<8x1xf32>
    %11 = arith.addf %9, %10 : vector<8x1xf32>
    %c0_7 = arith.constant 0 : index
    %c0_8 = arith.constant 0 : index
    %12 = vector.load %arg3[%c0_7, %c0_8] : memref<8x1xf32, #tpu.memory_space<vmem>>, vector<8x1xf32>
    tpu.vector_store %arg3[%c0_7, %c0_8], %11 {strides = array<i32>} : memref<8x1xf32, #tpu.memory_space<vmem>>, vector<8x1xf32>,
    return
  }
}

</mosaic_0001>

<llo_original>
// kernel: linear_forward.1
$region0: #{linear_forward.1}
  #allocation0 [shape = 'u32[]', space=smem, size = 0x4, offset = 0x4, fixed_abs, tag = 'smem constant byte address 0x4 - core index']
  #allocation1 [shape = 'u32[144,128]{1,0:T(1,128)}', space=vmem, size = 0x12000, scoped, tag = 'internal scratch']
  #allocation2 [shape = 'f32[1]{0:T(128)S(6)}', space=smem, size = 0x200, scoped, tag = 'scoped memory for linear_forward.1']
  %s0 = inlined_call_operand.vmem [shape: f32[1,2], index: 0, kind: input, shape index: {}]
  %s1 = inlined_call_operand.<no memory space> [shape: f32[1], index: 1, kind: input, shape index: {}]
  %s2 = inlined_call_operand.vmem [shape: f32[8,2], index: 2, kind: input, shape index: {}]
  %s3 = inlined_call_operand.vmem [shape: f32[8,1], index: 3, kind: output, shape index: {}]
  %s4 = sld [smem:[#allocation0]]
  $region26: #{linear_forward.1} parent=0
    _
  %s6 = ssub.s32 1, %s4
  %s7 = scalar_select 0, %s6, %s4
  %8 = sst [smem:[#allocation2]] %s1
  $region1: #{linear_forward.1} parent=0
    #allocation3 [shape = 'u8[512]{0}', space=smem, size = 0x200, scoped, tag = 'input window, operand 0, single buffered']
    #allocation4 [shape = 's32[1]{0}', space=sflag, size = 0x4, scoped, tag = 'scoped memory for linear_forward.1']
    %9 = vsyncpa [#allocation4], 0
    // Predicated region
    $region2: #{linear_forward.1} parent=1 // pred_check
      _
    $region3: #{linear_forward.1} parent=1 // pred_check_branch
      %11 = sbr.rel (0) target = $region5
    $region4: #{linear_forward.1} parent=1 // pred_region
      %s13 = ssub.s32 16, 16
      %14 = vsyncadd [#allocation4], %s13
      %s16 = sshll.u32 %s0, 4
      %s17 = int_to_ptr.vmem [resolvable:$true] %s16
      %19 = dma.vmem_to_smem %s17, 16, [#allocation3], [#allocation4]
    $region5: #{linear_forward.1} parent=1 // pred_fallthru
      _
    // Predicated region
    $region6: #{linear_forward.1} parent=1 // pred_check
      _
    $region7: #{linear_forward.1} parent=1 // pred_check_branch
      %21 = sbr.rel (0) target = $region9
    $region8: #{linear_forward.1} parent=1 // pred_region
      _
    $region9: #{linear_forward.1} parent=1 // pred_fallthru
      _
    // Predicated region
    $region10: #{linear_forward.1} parent=1 // pred_check
      _
    $region11: #{linear_forward.1} parent=1 // pred_check_branch
      %23 = sbr.rel (0) target = $region13
    $region12: #{linear_forward.1} parent=1 // pred_region
      _
    $region13: #{linear_forward.1} parent=1 // pred_fallthru
      _
    // Predicated region
    $region14: #{linear_forward.1} parent=1 // pred_check
      _
    $region15: #{linear_forward.1} parent=1 // pred_check_branch
      %25 = sbr.rel (0) target = $region17
    $region16: #{linear_forward.1} parent=1 // pred_region
      %26 = dma.done [#allocation4], 16
    $region17: #{linear_forward.1} parent=1 // pred_fallthru
      _
    %27 = sfence
    %s28 = sld [smem:[#allocation3]]
    %s29 = sld [smem:[#allocation3 + $0x1]]
    %s30 = sld [smem:[#allocation2]]
    %v31 = vld [vmem:[%s2] sm:$0xff]
    %v32 = vstv %s28
    %v33 = vmul.f32 %v31, %v32
    %v34 = vstv %s29
    %v35 = vmul.f32 %v31, %v34
    %37 = vrot.lane.b32.xlu0 %v35, 127
    %v38 = vpop.permute.xlu0 %37
    %v40 = vadd.f32 %v33, %v38
    %v41 = vstv %s30
    %v42 = vadd.f32 %v40, %v41
    %vm43 = vcmask 7168
    %44 = vst.msk [vmem:[%s3] sm:$0xff] %vm43, %v42
    // Predicated region
    $region18: #{linear_forward.1} parent=1 // pred_check
      _
    $region19: #{linear_forward.1} parent=1 // pred_check_branch
      %46 = sbr.rel (0) target = $region21
    $region20: #{linear_forward.1} parent=1 // pred_region
      _
    $region21: #{linear_forward.1} parent=1 // pred_fallthru
      _
    // Predicated region
    $region22: #{linear_forward.1} parent=1 // pred_check
      _
    $region23: #{linear_forward.1} parent=1 // pred_check_branch
      %48 = sbr.rel (0) target = $region25
    $region24: #{linear_forward.1} parent=1 // pred_region
      _
    $region25: #{linear_forward.1} parent=1 // pred_fallthru
      _
    %49 = vsyncpa [#allocation4], 1

</llo_original>
